<compile_context>
chip_gen: v7x
topology: tpu7x:2x2x1
jax: 0.10.0
libtpu: 0.0.40
codegen_flags: <defaults>
</compile_context>

<pallas_src>
import functools
import math

import jax
import jax.numpy as jnp
from jax.experimental import pallas as pl
from jax.experimental.pallas import tpu as pltpu


def _time2vec_kernel(x_ref, p_ref, o_ref, *, groups, periodic_fn):
    """One row tile of Time2Vec.

    x_ref: (T, groups)        packed tau values (lane group g of output row r <- tau[r*groups+g])
    p_ref: (groups+2, lane)   rows 0..groups-1: block-diag scatter weights S
                              row groups     : fused bias row ([b, b0] tiled over groups)
                              row groups+1   : periodic-lane mask (1.0 periodic / 0.0 linear)
    o_ref: (T, lane)          lane-dense output; row-major identical to (T*groups, dim)
    """
    x = x_ref[...]
    s = p_ref[0:groups, :]
    bias = p_ref[groups:groups + 1, :]
    mask = p_ref[groups + 1:groups + 2, :]

    if groups > 1:
        # Group replication + weight multiply on the MXU (free VLIW slot here).
        # HIGHEST precision => numerically exact f32 tau*w (S is block-diagonal).
        z = jnp.dot(x, s, preferred_element_type=jnp.float32,
                    precision=jax.lax.Precision.HIGHEST) + bias
    else:
        # groups == 1: plain VPU outer-product broadcast (in_features == 1 Linear).
        z = x * s + bias

    out = jnp.where(mask > 0.5, periodic_fn(z), z)
    o_ref[...] = out.astype(o_ref.dtype)


def time2vec(x, w, b, w0, b0, *, activation="sin", tile_rows=4096,
             out_dtype=jnp.float32):
    """x: (..., 1) float32 tau.  Returns (..., dim) matching the PyTorch module.

    w: (dim-1, 1), b: (dim-1,), w0: (1, 1), b0: (1,)  — nn.Linear parameters.
    out_dtype: keep f32 (reference semantics); bf16 halves writeback bytes if the
    downstream TrajectoryEncoder consumes bf16.
    """
    if activation not in ("sin", "cos"):
        raise ValueError(f"unsupported activation: {activation!r}")
    assert x.shape[-1] == 1, "Time2Vec expects tau with a trailing dim of 1"
    assert tile_rows > 0 and tile_rows % 8 == 0, "tile_rows must be a positive multiple of 8"

    dim = w.shape[0] + 1
    lead_shape = x.shape[:-1]
    n = math.prod(lead_shape) if lead_shape else 1
    assert n > 0, "empty input"

    out_dtype = jnp.dtype(out_dtype)
    out_itemsize = out_dtype.itemsize
    row_align = 8 if out_itemsize == 4 else 16       # sublane alignment of row blocks

    # Lane-dense packing: `groups` taus share one 128-lane output row.
    if dim <= 128 and 128 % dim == 0:
        groups = 128 // dim
    else:
        groups = 1                                   # lane = dim (still full-extent blocks)
    lane = groups * dim
    lane_padded = max(lane, 128)                     # VMEM lane padding of narrow blocks

    # Pad flattened tau so (a) rows pack exactly into lane groups and (b) the
    # packed row count is sublane-aligned -> every store is full & unmasked.
    pad_to = groups * row_align
    n_pad = pl.cdiv(n, pad_to) * pad_to
    x_flat = x.reshape(-1).astype(jnp.float32)
    if n_pad != n:
        x_flat = jnp.pad(x_flat, (0, n_pad - n))
    n_rows = n_pad // groups
    x2d = x_flat.reshape(n_rows, groups)

    # Fused, resident parameter block (groups+2, lane):
    #   rows 0..groups-1 : block-diagonal scatter weights (per-group [w, w0])
    #   row groups       : bias row ([b, b0] tiled over groups)
    #   row groups+1     : periodic-vs-linear lane mask (precomputed, no in-kernel iota)
    w_full = jnp.concatenate([w.reshape(-1), w0.reshape(-1)]).astype(jnp.float32)   # (dim,)
    b_full = jnp.concatenate([b.reshape(-1), b0.reshape(-1)]).astype(jnp.float32)   # (dim,)
    scatter = jnp.kron(jnp.eye(groups, dtype=jnp.float32), w_full[None, :])         # (groups, lane)
    b_row = jnp.tile(b_full, groups)[None, :]                                       # (1, lane)
    mask_row = jnp.tile((jnp.arange(dim) < dim - 1).astype(jnp.float32),
                        groups)[None, :]                                            # (1, lane)
    params = jnp.concatenate([scatter, b_row, mask_row], axis=0)                    # (groups+2, lane)

    # ---- Row-tile selection with explicit VMEM accounting --------------------
    t = min(tile_rows, n_rows)
    # v7x has 2 TensorCores: keep >= 4 "parallel" grid steps when there is
    # enough work so the grid can shard across cores (moot on v5e/v6e).
    if n_rows >= 4 * 1024:
        t = min(t, pl.cdiv(n_rows, 4))
    t = max(row_align, (t // row_align) * row_align)

    def _vmem_need(t_rows):
        in_blk = t_rows * 128 * 4                      # (T, groups) f32, lane-padded to 128
        out_blk = t_rows * lane_padded * out_itemsize  # (T, lane) output block
        temps = 2 * t_rows * lane_padded * 4           # z / sin(z) working tiles
        return 2 * (in_blk + out_blk) + temps + (2 << 20)   # double-buffered + headroom

    try:
        phys_vmem = int(pltpu.get_tpu_info().vmem_capacity_bytes)
    except Exception:
        phys_vmem = 64 << 20                           # conservative (v7x per-TC VMEM)
    vmem_budget = (phys_vmem * 3) // 4
    while _vmem_need(t) > vmem_budget and t > row_align:
        t = max(row_align, ((t // 2) // row_align) * row_align)
    vmem_limit = int(min(max(_vmem_need(t), 32 << 20), vmem_budget))

    grid = (pl.cdiv(n_rows, t),)

    periodic_fn = jnp.sin if activation == "sin" else jnp.cos
    kernel = functools.partial(_time2vec_kernel, groups=groups, periodic_fn=periodic_fn)

    cost = pl.CostEstimate(
        flops=int((2 * groups + 4) * n_rows * lane),
        transcendentals=int(n_pad * (dim - 1)),
        bytes_accessed=int(n_rows * groups * 4 + n_rows * lane * out_itemsize
                           + params.size * 4),
    )

    out2d = pl.pallas_call(
        kernel,
        out_shape=jax.ShapeDtypeStruct((n_rows, lane), out_dtype),
        grid_spec=pltpu.PrefetchScalarGridSpec(
            num_scalar_prefetch=0,
            grid=grid,
            in_specs=[
                pl.BlockSpec((t, groups), lambda i: (i, 0)),
                pl.BlockSpec((groups + 2, lane), lambda i: (0, 0)),   # resident params
            ],
            out_specs=pl.BlockSpec((t, lane), lambda i: (i, 0)),
        ),
        compiler_params=pltpu.CompilerParams(
            dimension_semantics=("parallel",),
            vmem_limit_bytes=vmem_limit,
        ),
        cost_estimate=cost,
    )(x2d, params)

    # (n_rows, lane) row-major is bit-identical to (n_pad, dim); reshape is free,
    # the [:n] slice only materializes when padding was actually added.
    out = out2d.reshape(n_pad, dim)
    if n_pad != n:
        out = out[:n]
    return out.reshape(*lead_shape, dim)


def time2vec_ref(x, w, b, w0, b0, *, activation="sin"):
    f = jnp.sin if activation == "sin" else jnp.cos
    v1 = f(x * w[:, 0] + b)        # (..., dim-1)   (in_features == 1 Linear)
    v2 = x * w0[:, 0] + b0         # (..., 1)
    return jnp.concatenate([v1, v2], axis=-1)


if __name__ == "__main__":
    key = jax.random.PRNGKey(0)
    keys = jax.random.split(key, 16)

    def make_params(k, dim):
        kw, kb, kw0, kb0 = jax.random.split(k, 4)
        bound = 1.0   # nn.Linear(1, .) init bound = 1/sqrt(in_features) = 1
        w = jax.random.uniform(kw, (dim - 1, 1), jnp.float32, -bound, bound)
        b = jax.random.uniform(kb, (dim - 1,), jnp.float32, -bound, bound)
        w0 = jax.random.uniform(kw0, (1, 1), jnp.float32, -bound, bound)
        b0 = jax.random.uniform(kb0, (1,), jnp.float32, -bound, bound)
        return w, b, w0, b0

    # Module config: Time2Vec('sin', dim=32) -> SineActivation(1, 32).
    p32 = make_params(keys[0], 32)
    p48 = make_params(keys[1], 48)   # exercises the groups=1 (dim !| 128) path

    # (shape, dim, activation, tile_rows) — exercise: tiny padded block, multi-block
    # grid, ragged tail block, pad-to-group path, default-tile + >=4-step grid,
    # and the groups==1 VPU fallback.
    cases = [
        ((2, 8, 1),     32, "sin", 4096),
        ((4, 1024, 1),  32, "sin", 512),
        ((2, 150, 1),   32, "sin", 64),
        ((3, 37, 1),    32, "cos", 64),
        ((16, 1024, 1), 32, "sin", 4096),
        ((2, 20, 1),    48, "cos", 64),
    ]

    for idx, (shape, dim, act, tr) in enumerate(cases):
        prm = p32 if dim == 32 else p48
        x = jax.random.normal(keys[4 + idx], shape, jnp.float32)
        out = jax.block_until_ready(time2vec(x, *prm, activation=act, tile_rows=tr))
        ref = time2vec_ref(x, *prm, activation=act)
        assert out.shape == (*shape[:-1], dim), (out.shape, shape, dim)
        assert jnp.allclose(out, ref, atol=1e-5, rtol=1e-5), \
            f"mismatch for {shape} / dim={dim} / {act}"

    # Optional bf16 writeback path (bandwidth win on v5e/v6e if downstream is bf16).
    x = jax.random.normal(keys[12], (4, 256, 1), jnp.float32)
    out_bf16 = jax.block_until_ready(
        time2vec(x, *p32, activation="sin", tile_rows=128, out_dtype=jnp.bfloat16))
    ref_bf16 = time2vec_ref(x, *p32, activation="sin")
    assert out_bf16.dtype == jnp.bfloat16
    assert jnp.allclose(out_bf16.astype(jnp.float32), ref_bf16, atol=2e-2, rtol=2e-2)

    print("KERNEL_OK")
</pallas_src>

<mosaic_0001>
module attributes {stable_mosaic.version = 11 : i64} {
  func.func @_time2vec_kernel(%arg0: i32, %arg1: memref<8x4xf32, #tpu.memory_space<vmem>>, %arg2: memref<6x128xf32, #tpu.memory_space<vmem>>, %arg3: memref<8x128xf32, #tpu.memory_space<vmem>>) attributes {dimension_semantics = [#tpu.dimension_semantics<parallel>], iteration_bounds = array<i64: 1>, scalar_prefetch = 0 : i64, scratch_operands = 0 : i64, tpu.core_type = #tpu.core_type<tc>, window_params = [{transform_indices = @transform_0, window_bounds = array<i64: 8, 4>}, {pipeline_mode = #tpu.pipeline_mode<synchronous>, transform_indices = @transform_1, window_bounds = array<i64: 6, 128>}, {transform_indices = @transform_2, window_bounds = array<i64: 8, 128>}]} {
    %c0 = arith.constant 0 : index
    %c0_0 = arith.constant 0 : index
    %0 = vector.load %arg1[%c0, %c0_0] : memref<8x4xf32, #tpu.memory_space<vmem>>, vector<8x4xf32>
    %c0_1 = arith.constant 0 : index
    %c0_2 = arith.constant 0 : index
    %1 = vector.load %arg2[%c0_1, %c0_2] : memref<6x128xf32, #tpu.memory_space<vmem>>, vector<4x128xf32>
    %c4 = arith.constant 4 : index
    %c0_3 = arith.constant 0 : index
    %2 = vector.load %arg2[%c4, %c0_3] : memref<6x128xf32, #tpu.memory_space<vmem>>, vector<1x128xf32>
    %c5 = arith.constant 5 : index
    %c0_4 = arith.constant 0 : index
    %3 = vector.load %arg2[%c5, %c0_4] : memref<6x128xf32, #tpu.memory_space<vmem>>, vector<1x128xf32>
    %cst = arith.constant dense<0.000000e+00> : vector<8x128xf32>
    %4 = tpu.matmul %0, %1, %cst {dimension_numbers = #tpu.dot_dimension_numbers<[1], [0], [0], [1], [0, 0, 1, 1], [], []>, precision = #tpu.contract_precision<fp32>} : vector<8x4xf32>, vector<4x128xf32>, vector<8x128xf32> -> vector<8x128xf32>
    %5 = vector.broadcast %2 : vector<1x128xf32> to vector<8x128xf32>
    %6 = arith.addf %4, %5 : vector<8x128xf32>
    %cst_5 = arith.constant 5.000000e-01 : f32
    %7 = vector.broadcast %cst_5 : f32 to vector<1x128xf32>
    %8 = arith.cmpf ogt, %3, %7 : vector<1x128xf32>
    %9 = math.sin %6 : vector<8x128xf32>
    %10 = vector.shape_cast %8 : vector<1x128xi1> to vector<1x128xi1>
    %11 = vector.broadcast %10 : vector<1x128xi1> to vector<8x128xi1>
    %12 = arith.select %11, %9, %6 : vector<8x128xi1>, vector<8x128xf32>
    %c0_6 = arith.constant 0 : index
    %c0_7 = arith.constant 0 : index
    %13 = vector.load %arg3[%c0_6, %c0_7] : memref<8x128xf32, #tpu.memory_space<vmem>>, vector<8x128xf32>
    tpu.vector_store %arg3[%c0_6, %c0_7], %12 {strides = array<i32>} : memref<8x128xf32, #tpu.memory_space<vmem>>, vector<8x128xf32>,
    return
  }
  func.func @transform_0(%arg0: i32) -> (i32, i32) {
    %c0_i32 = arith.constant 0 : i32
    %c0_i32_0 = arith.constant 0 : i32
    return %arg0, %c0_i32 : i32, i32
  }
  func.func @transform_1(%arg0: i32) -> (i32, i32) {
    %c0_i32 = arith.constant 0 : i32
    %c0_i32_0 = arith.constant 0 : i32
    %c0_i32_1 = arith.constant 0 : i32
    return %c0_i32, %c0_i32_0 : i32, i32
  }
  func.func @transform_2(%arg0: i32) -> (i32, i32) {
    %c0_i32 = arith.constant 0 : i32
    %c0_i32_0 = arith.constant 0 : i32
    return %arg0, %c0_i32 : i32, i32
  }
}

</mosaic_0001>

<llo_original>
// kernel: tpu_custom_call.1
$region0: #{tpu_custom_call.1}
  #allocation0 [shape = 'u32[]', space=smem, size = 0x4, offset = 0x4, fixed_abs, tag = 'smem constant byte address 0x4 - core index']
  #allocation1 [shape = 'u32[144,128]{1,0:T(1,128)}', space=vmem, size = 0x12000, scoped, tag = 'internal scratch']
  %s0 = inlined_call_operand.vmem [shape: f32[8,4], index: 0, kind: input, shape index: {}]
  %s1 = inlined_call_operand.vmem [shape: f32[6,128], index: 1, kind: input, shape index: {}]
  %s2 = inlined_call_operand.hbm [shape: f32[8,128], index: 2, kind: output, shape index: {}]
  %s3 = sld [smem:[#allocation0]]
  $region18: #{tpu_custom_call.1} parent=0
    _
  %s5 = ssub.s32 1, %s3
  %s6 = scalar_select 0, %s5, %s3
  $region1: #{tpu_custom_call.1} parent=0
    #allocation2 [shape = 'u8[4096]{0}', space=vmem, size = 0x1000, scoped, tag = 'output window, operand 0, single buffered']
    #allocation3 [shape = 's32[1]{0}', space=sflag, size = 0x4, scoped, tag = 'scoped memory for tpu_custom_call.1']
    %7 = vsyncpa [#allocation3], 0
    // Predicated region
    $region2: #{tpu_custom_call.1} parent=1 // pred_check
      _
    $region3: #{tpu_custom_call.1} parent=1 // pred_check_branch
      %9 = sbr.rel (0) target = $region5
    $region4: #{tpu_custom_call.1} parent=1 // pred_region
      _
    $region5: #{tpu_custom_call.1} parent=1 // pred_fallthru
      _
    // Predicated region
    $region6: #{tpu_custom_call.1} parent=1 // pred_check
      _
    $region7: #{tpu_custom_call.1} parent=1 // pred_check_branch
      %11 = sbr.rel (0) target = $region9
    $region8: #{tpu_custom_call.1} parent=1 // pred_region
      _
    $region9: #{tpu_custom_call.1} parent=1 // pred_fallthru
      _
    %v12 = vld [vmem:[%s0] sm:$0xff]
    %v13 = vld [vmem:[%s1] sm:$0xf]
    %v14 = vld [vmem:[%s1 + $0x4] sm:$0x1]
    %v15 = vld [vmem:[%s1 + $0x5] sm:$0x1]
    %v16 = vlaneseq
    %v17 = vshrl.u32 %v16, 7
    %v18 = vsub.s32 0, %v17
    %v19 = vrot.slane %v14, %v18
    %vm20 = vcmask 31744
    %v22 = vsel %vm20, %v12, 0
    %vm24 = vcmask 1043456
    %v26 = vsel %vm24, %v13, 0
    %28 = vmatprep.subr.mxu0 0.0
    %v29 = vand.u32 %v26, 4294901760
    %30 = vmatpush1.msra.mxu0 %v29
    %31 = vmatprep.subr.mxu0 0.0
    %32 = vmatpush1.msra.mxu0 0.0
    %33 = vmatprep.subr.mxu0 0.0
    %34 = vmatpush1.msra.mxu0 0.0
    %35 = vmatprep.subr.mxu0 0.0
    %36 = vmatpush1.msra.mxu0 0.0
    %37 = vmatprep.subr.mxu0 0.0
    %38 = vmatpush1.msra.mxu0 0.0
    %39 = vmatprep.subr.mxu0 0.0
    %40 = vmatpush1.msra.mxu0 0.0
    %41 = vmatprep.subr.mxu0 0.0
    %42 = vmatpush1.msra.mxu0 0.0
    %43 = vmatprep.subr.mxu0 0.0
    %44 = vmatpush1.msra.mxu0 0.0
    %45 = vmatprep.subr.mxu0 0.0
    %46 = vmatpush1.msra.mxu0 0.0
    %47 = vmatprep.subr.mxu0 0.0
    %48 = vmatpush1.msra.mxu0 0.0
    %49 = vmatprep.subr.mxu0 0.0
    %50 = vmatpush1.msra.mxu0 0.0
    %51 = vmatprep.subr.mxu0 0.0
    %52 = vmatpush1.msra.mxu0 0.0
    %53 = vmatprep.subr.mxu0 0.0
    %54 = vmatpush1.msra.mxu0 0.0
    %55 = vmatprep.subr.mxu0 0.0
    %56 = vmatpush1.msra.mxu0 0.0
    %57 = vmatprep.subr.mxu0 0.0
    %58 = vmatpush1.msra.mxu0 0.0
    %59 = vmatprep.subr.mxu0 0.0
    %60 = vmatpush1.msra.mxu0 0.0
    %61 = vmatprep.subr.mxu0 0.0
    %62 = vmatpush1.msra.mxu0 0.0
    %63 = vmatprep.subr.mxu0 0.0
    %64 = vmatpush1.msra.mxu0 0.0
    %65 = vmatprep.subr.mxu0 0.0
    %66 = vmatpush1.msra.mxu0 0.0
    %67 = vmatprep.subr.mxu0 0.0
    %68 = vmatpush1.msra.mxu0 0.0
    %69 = vmatprep.subr.mxu0 0.0
    %70 = vmatpush1.msra.mxu0 0.0
    %71 = vmatprep.subr.mxu0 0.0
    %72 = vmatpush1.msra.mxu0 0.0
    %73 = vmatprep.subr.mxu0 0.0
    %74 = vmatpush1.msra.mxu0 0.0
    %75 = vmatprep.subr.mxu0 0.0
    %76 = vmatpush1.msra.mxu0 0.0
    %77 = vmatprep.subr.mxu0 0.0
    %78 = vmatpush1.msra.mxu0 0.0
    %79 = vmatprep.subr.mxu0 0.0
    %80 = vmatpush1.msra.mxu0 0.0
    %81 = vmatprep.subr.mxu0 0.0
    %82 = vmatpush1.msra.mxu0 0.0
    %83 = vmatprep.subr.mxu0 0.0
    %84 = vmatpush1.msra.mxu0 0.0
    %85 = vmatprep.subr.mxu0 0.0
    %86 = vmatpush1.msra.mxu0 0.0
    %87 = vmatprep.subr.mxu0 0.0
    %88 = vmatpush1.msra.mxu0 0.0
    %89 = vmatprep.subr.mxu0 0.0
    %90 = vmatpush1.msra.mxu0 0.0
    %91 = vmatprep.subr.mxu0 0.0
    %92 = vmatpush1.msra.mxu0 0.0
    %93 = vmatprep.mubr.f32.mxu0 0.0
    %v94 = vand.u32 %v22, 4294901760
    %v95 = vsub.f32 %v22, %v94
    %v96 = vand.u32 %v95, 4294901760
    %v97 = vsub.f32 %v95, %v96
    %v98 = vand.u32 %v97, 4294901760
    %99 = vmatmul.mubr.f32.gmra.mrb[0].mxu0 %v98
    %v100 = vpop.f32.mrb[0].mxu0
    %v101 = vadd.f32 %v19, %v100
    %v102 = vpop.f32.mrb[0].mxu0
    %103 = vdwg.mxu0
    %104 = vmatprep.subr.mxu0 0.0
    %v105 = vand.u32 %v26, 4294901760
    %v106 = vsub.f32 %v26, %v105
    %v107 = vand.u32 %v106, 4294901760
    %v108 = vsub.f32 %v106, %v107
    %v109 = vand.u32 %v108, 4294901760
    %110 = vmatpush1.msra.mxu0 %v109
    %111 = vmatprep.subr.mxu0 0.0
    %112 = vmatpush1.msra.mxu0 0.0
    %113 = vmatprep.subr.mxu0 0.0
    %114 = vmatpush1.msra.mxu0 0.0
    %115 = vmatprep.subr.mxu0 0.0
    %116 = vmatpush1.msra.mxu0 0.0
    %117 = vmatprep.subr.mxu0 0.0
    %118 = vmatpush1.msra.mxu0 0.0
    %119 = vmatprep.subr.mxu0 0.0
    %120 = vmatpush1.msra.mxu0 0.0
    %121 = vmatprep.subr.mxu0 0.0
    %122 = vmatpush1.msra.mxu0 0.0
    %123 = vmatprep.subr.mxu0 0.0
    %124 = vmatpush1.msra.mxu0 0.0
    %125 = vmatprep.subr.mxu0 0.0
    %126 = vmatpush1.msra.mxu0 0.0
    %127 = vmatprep.subr.mxu0 0.0
    %128 = vmatpush1.msra.mxu0 0.0
    %129 = vmatprep.subr.mxu0 0.0
    %130 = vmatpush1.msra.mxu0 0.0
    %131 = vmatprep.subr.mxu0 0.0
    %132 = vmatpush1.msra.mxu0 0.0
    %133 = vmatprep.subr.mxu0 0.0
    %134 = vmatpush1.msra.mxu0 0.0
    %135 = vmatprep.subr.mxu0 0.0
    %136 = vmatpush1.msra.mxu0 0.0
    %137 = vmatprep.subr.mxu0 0.0
    %138 = vmatpush1.msra.mxu0 0.0
    %139 = vmatprep.subr.mxu0 0.0
    %140 = vmatpush1.msra.mxu0 0.0
    %141 = vmatprep.subr.mxu0 0.0
    %142 = vmatpush1.msra.mxu0 0.0
    %143 = vmatprep.subr.mxu0 0.0
    %144 = vmatpush1.msra.mxu0 0.0
    %145 = vmatprep.subr.mxu0 0.0
    %146 = vmatpush1.msra.mxu0 0.0
    %147 = vmatprep.subr.mxu0 0.0
    %148 = vmatpush1.msra.mxu0 0.0
    %149 = vmatprep.subr.mxu0 0.0
    %150 = vmatpush1.msra.mxu0 0.0
    %151 = vmatprep.subr.mxu0 0.0
    %152 = vmatpush1.msra.mxu0 0.0
    %153 = vmatprep.subr.mxu0 0.0
    %154 = vmatpush1.msra.mxu0 0.0
    %155 = vmatprep.subr.mxu0 0.0
    %156 = vmatpush1.msra.mxu0 0.0
    %157 = vmatprep.subr.mxu0 0.0
    %158 = vmatpush1.msra.mxu0 0.0
    %159 = vmatprep.subr.mxu0 0.0
    %160 = vmatpush1.msra.mxu0 0.0
    %161 = vmatprep.subr.mxu0 0.0
    %162 = vmatpush1.msra.mxu0 0.0
    %163 = vmatprep.subr.mxu0 0.0
    %164 = vmatpush1.msra.mxu0 0.0
    %165 = vmatprep.subr.mxu0 0.0
    %166 = vmatpush1.msra.mxu0 0.0
    %167 = vmatprep.subr.mxu0 0.0
    %168 = vmatpush1.msra.mxu0 0.0
    %169 = vmatprep.subr.mxu0 0.0
    %170 = vmatpush1.msra.mxu0 0.0
    %171 = vmatprep.subr.mxu0 0.0
    %172 = vmatpush1.msra.mxu0 0.0
    %173 = vmatprep.mubr.f32.mxu0 0.0
    %v174 = vand.u32 %v22, 4294901760
    %175 = vmatmul.mubr.f32.gmra.mrb[0].mxu0 %v174
    %v176 = vpop.f32.mrb[0].mxu0
    %v177 = vadd.f32 %v101, %v176
    %v178 = vpop.f32.mrb[0].mxu0
    %179 = vdwg.mxu0
    %180 = vmatprep.subr.mxu0 0.0
    %v181 = vand.u32 %v26, 4294901760
    %v182 = vsub.f32 %v26, %v181
    %183 = vmatpush1.msra.mxu0 %v182
    %184 = vmatprep.subr.mxu0 0.0
    %185 = vmatpush1.msra.mxu0 0.0
    %186 = vmatprep.subr.mxu0 0.0
    %187 = vmatpush1.msra.mxu0 0.0
    %188 = vmatprep.subr.mxu0 0.0
    %189 = vmatpush1.msra.mxu0 0.0
    %190 = vmatprep.subr.mxu0 0.0
    %191 = vmatpush1.msra.mxu0 0.0
    %192 = vmatprep.subr.mxu0 0.0
    %193 = vmatpush1.msra.mxu0 0.0
    %194 = vmatprep.subr.mxu0 0.0
    %195 = vmatpush1.msra.mxu0 0.0
    %196 = vmatprep.subr.mxu0 0.0
    %197 = vmatpush1.msra.mxu0 0.0
    %198 = vmatprep.subr.mxu0 0.0
    %199 = vmatpush1.msra.mxu0 0.0
    %200 = vmatprep.subr.mxu0 0.0
    %201 = vmatpush1.msra.mxu0 0.0
    %202 = vmatprep.subr.mxu0 0.0
    %203 = vmatpush1.msra.mxu0 0.0
    %204 = vmatprep.subr.mxu0 0.0
    %205 = vmatpush1.msra.mxu0 0.0
    %206 = vmatprep.subr.mxu0 0.0
    %207 = vmatpush1.msra.mxu0 0.0
    %208 = vmatprep.subr.mxu0 0.0
    %209 = vmatpush1.msra.mxu0 0.0
    %210 = vmatprep.subr.mxu0 0.0
    %211 = vmatpush1.msra.mxu0 0.0
    %212 = vmatprep.subr.mxu0 0.0
    %213 = vmatpush1.msra.mxu0 0.0
    %214 = vmatprep.subr.mxu0 0.0
    %215 = vmatpush1.msra.mxu0 0.0
    %216 = vmatprep.subr.mxu0 0.0
    %217 = vmatpush1.msra.mxu0 0.0
    %218 = vmatprep.subr.mxu0 0.0
    %219 = vmatpush1.msra.mxu0 0.0
    %220 = vmatprep.subr.mxu0 0.0
    %221 = vmatpush1.msra.mxu0 0.0
    %222 = vmatprep.subr.mxu0 0.0
    %223 = vmatpush1.msra.mxu0 0.0
    %224 = vmatprep.subr.mxu0 0.0
    %225 = vmatpush1.msra.mxu0 0.0
    %226 = vmatprep.subr.mxu0 0.0
    %227 = vmatpush1.msra.mxu0 0.0
    %228 = vmatprep.subr.mxu0 0.0
    %229 = vmatpush1.msra.mxu0 0.0
    %230 = vmatprep.subr.mxu0 0.0
    %231 = vmatpush1.msra.mxu0 0.0
    %232 = vmatprep.subr.mxu0 0.0
    %233 = vmatpush1.msra.mxu0 0.0
    %234 = vmatprep.subr.mxu0 0.0
    %235 = vmatpush1.msra.mxu0 0.0
    %236 = vmatprep.subr.mxu0 0.0
    %237 = vmatpush1.msra.mxu0 0.0
    %238 = vmatprep.subr.mxu0 0.0
    %239 = vmatpush1.msra.mxu0 0.0
    %240 = vmatprep.subr.mxu0 0.0
    %241 = vmatpush1.msra.mxu0 0.0
    %242 = vmatprep.subr.mxu0 0.0
    %243 = vmatpush1.msra.mxu0 0.0
    %244 = vmatprep.subr.mxu0 0.0
    %245 = vmatpush1.msra.mxu0 0.0
    %246 = vmatprep.mubr.f32.mxu0 0.0
    %v247 = vand.u32 %v22, 4294901760
    %v248 = vsub.f32 %v22, %v247
    %249 = vmatmul.mubr.f32.gmra.mrb[0].mxu0 %v248
    %v250 = vpop.f32.mrb[0].mxu0
    %v251 = vadd.f32 %v177, %v250
    %v252 = vpop.f32.mrb[0].mxu0
    %253 = vdwg.mxu0
    %254 = vmatprep.subr.mxu0 0.0
    %v255 = vand.u32 %v26, 4294901760
    %256 = vmatpush1.msra.mxu0 %v255
    %257 = vmatprep.subr.mxu0 0.0
    %258 = vmatpush1.msra.mxu0 0.0
    %259 = vmatprep.subr.mxu0 0.0
    %260 = vmatpush1.msra.mxu0 0.0
    %261 = vmatprep.subr.mxu0 0.0
    %262 = vmatpush1.msra.mxu0 0.0
    %263 = vmatprep.subr.mxu0 0.0
    %264 = vmatpush1.msra.mxu0 0.0
    %265 = vmatprep.subr.mxu0 0.0
    %266 = vmatpush1.msra.mxu0 0.0
    %267 = vmatprep.subr.mxu0 0.0
    %268 = vmatpush1.msra.mxu0 0.0
    %269 = vmatprep.subr.mxu0 0.0
    %270 = vmatpush1.msra.mxu0 0.0
    %271 = vmatprep.subr.mxu0 0.0
    %272 = vmatpush1.msra.mxu0 0.0
    %273 = vmatprep.subr.mxu0 0.0
    %274 = vmatpush1.msra.mxu0 0.0
    %275 = vmatprep.subr.mxu0 0.0
    %276 = vmatpush1.msra.mxu0 0.0
    %277 = vmatprep.subr.mxu0 0.0
    %278 = vmatpush1.msra.mxu0 0.0
    %279 = vmatprep.subr.mxu0 0.0
    %280 = vmatpush1.msra.mxu0 0.0
    %281 = vmatprep.subr.mxu0 0.0
    %282 = vmatpush1.msra.mxu0 0.0
    %283 = vmatprep.subr.mxu0 0.0
    %284 = vmatpush1.msra.mxu0 0.0
    %285 = vmatprep.subr.mxu0 0.0
    %286 = vmatpush1.msra.mxu0 0.0
    %287 = vmatprep.subr.mxu0 0.0
    %288 = vmatpush1.msra.mxu0 0.0
    %289 = vmatprep.subr.mxu0 0.0
    %290 = vmatpush1.msra.mxu0 0.0
    %291 = vmatprep.subr.mxu0 0.0
    %292 = vmatpush1.msra.mxu0 0.0
    %293 = vmatprep.subr.mxu0 0.0
    %294 = vmatpush1.msra.mxu0 0.0
    %295 = vmatprep.subr.mxu0 0.0
    %296 = vmatpush1.msra.mxu0 0.0
    %297 = vmatprep.subr.mxu0 0.0
    %298 = vmatpush1.msra.mxu0 0.0
    %299 = vmatprep.subr.mxu0 0.0
    %300 = vmatpush1.msra.mxu0 0.0
    %301 = vmatprep.subr.mxu0 0.0
    %302 = vmatpush1.msra.mxu0 0.0
    %303 = vmatprep.subr.mxu0 0.0
    %304 = vmatpush1.msra.mxu0 0.0
    %305 = vmatprep.subr.mxu0 0.0
    %306 = vmatpush1.msra.mxu0 0.0
    %307 = vmatprep.subr.mxu0 0.0
    %308 = vmatpush1.msra.mxu0 0.0
    %309 = vmatprep.subr.mxu0 0.0
    %310 = vmatpush1.msra.mxu0 0.0
    %311 = vmatprep.subr.mxu0 0.0
    %312 = vmatpush1.msra.mxu0 0.0
    %313 = vmatprep.subr.mxu0 0.0
    %314 = vmatpush1.msra.mxu0 0.0
    %315 = vmatprep.subr.mxu0 0.0
    %316 = vmatpush1.msra.mxu0 0.0
    %317 = vmatprep.subr.mxu0 0.0
    %318 = vmatpush1.msra.mxu0 0.0
    %319 = vmatprep.mubr.f32.mxu0 0.0
    %v320 = vand.u32 %v22, 4294901760
    %v321 = vsub.f32 %v22, %v320
    %v322 = vand.u32 %v321, 4294901760
    %323 = vmatmul.mubr.f32.gmra.mrb[0].mxu0 %v322
    %v324 = vpop.f32.mrb[0].mxu0
    %v325 = vadd.f32 %v251, %v324
    %v326 = vpop.f32.mrb[0].mxu0
    %327 = vdwg.mxu0
    %328 = vmatprep.subr.mxu0 0.0
    %v329 = vand.u32 %v26, 4294901760
    %v330 = vsub.f32 %v26, %v329
    %v331 = vand.u32 %v330, 4294901760
    %332 = vmatpush1.msra.mxu0 %v331
    %333 = vmatprep.subr.mxu0 0.0
    %334 = vmatpush1.msra.mxu0 0.0
    %335 = vmatprep.subr.mxu0 0.0
    %336 = vmatpush1.msra.mxu0 0.0
    %337 = vmatprep.subr.mxu0 0.0
    %338 = vmatpush1.msra.mxu0 0.0
    %339 = vmatprep.subr.mxu0 0.0
    %340 = vmatpush1.msra.mxu0 0.0
    %341 = vmatprep.subr.mxu0 0.0
    %342 = vmatpush1.msra.mxu0 0.0
    %343 = vmatprep.subr.mxu0 0.0
    %344 = vmatpush1.msra.mxu0 0.0
    %345 = vmatprep.subr.mxu0 0.0
    %346 = vmatpush1.msra.mxu0 0.0
    %347 = vmatprep.subr.mxu0 0.0
    %348 = vmatpush1.msra.mxu0 0.0
    %349 = vmatprep.subr.mxu0 0.0
    %350 = vmatpush1.msra.mxu0 0.0
    %351 = vmatprep.subr.mxu0 0.0
    %352 = vmatpush1.msra.mxu0 0.0
    %353 = vmatprep.subr.mxu0 0.0
    %354 = vmatpush1.msra.mxu0 0.0
    %355 = vmatprep.subr.mxu0 0.0
    %356 = vmatpush1.msra.mxu0 0.0
    %357 = vmatprep.subr.mxu0 0.0
    %358 = vmatpush1.msra.mxu0 0.0
    %359 = vmatprep.subr.mxu0 0.0
    %360 = vmatpush1.msra.mxu0 0.0
    %361 = vmatprep.subr.mxu0 0.0
    %362 = vmatpush1.msra.mxu0 0.0
    %363 = vmatprep.subr.mxu0 0.0
    %364 = vmatpush1.msra.mxu0 0.0
    %365 = vmatprep.subr.mxu0 0.0
    %366 = vmatpush1.msra.mxu0 0.0
    %367 = vmatprep.subr.mxu0 0.0
    %368 = vmatpush1.msra.mxu0 0.0
    %369 = vmatprep.subr.mxu0 0.0
    %370 = vmatpush1.msra.mxu0 0.0
    %371 = vmatprep.subr.mxu0 0.0
    %372 = vmatpush1.msra.mxu0 0.0
    %373 = vmatprep.subr.mxu0 0.0
    %374 = vmatpush1.msra.mxu0 0.0
    %375 = vmatprep.subr.mxu0 0.0
    %376 = vmatpush1.msra.mxu0 0.0
    %377 = vmatprep.subr.mxu0 0.0
    %378 = vmatpush1.msra.mxu0 0.0
    %379 = vmatprep.subr.mxu0 0.0
    %380 = vmatpush1.msra.mxu0 0.0
    %381 = vmatprep.subr.mxu0 0.0
    %382 = vmatpush1.msra.mxu0 0.0
    %383 = vmatprep.subr.mxu0 0.0
    %384 = vmatpush1.msra.mxu0 0.0
    %385 = vmatprep.subr.mxu0 0.0
    %386 = vmatpush1.msra.mxu0 0.0
    %387 = vmatprep.subr.mxu0 0.0
    %388 = vmatpush1.msra.mxu0 0.0
    %389 = vmatprep.subr.mxu0 0.0
    %390 = vmatpush1.msra.mxu0 0.0
    %391 = vmatprep.subr.mxu0 0.0
    %392 = vmatpush1.msra.mxu0 0.0
    %393 = vmatprep.subr.mxu0 0.0
    %394 = vmatpush1.msra.mxu0 0.0
    %395 = vmatprep.mubr.f32.mxu0 0.0
    %v396 = vand.u32 %v22, 4294901760
    %397 = vmatmul.mubr.f32.gmra.mrb[0].mxu0 %v396
    %v398 = vpop.f32.mrb[0].mxu0
    %v399 = vadd.f32 %v325, %v398
    %v400 = vpop.f32.mrb[0].mxu0
    %401 = vdwg.mxu0
    %402 = vmatprep.subr.mxu0 0.0
    %v403 = vand.u32 %v26, 4294901760
    %404 = vmatpush1.msra.mxu0 %v403
    %405 = vmatprep.subr.mxu0 0.0
    %406 = vmatpush1.msra.mxu0 0.0
    %407 = vmatprep.subr.mxu0 0.0
    %408 = vmatpush1.msra.mxu0 0.0
    %409 = vmatprep.subr.mxu0 0.0
    %410 = vmatpush1.msra.mxu0 0.0
    %411 = vmatprep.subr.mxu0 0.0
    %412 = vmatpush1.msra.mxu0 0.0
    %413 = vmatprep.subr.mxu0 0.0
    %414 = vmatpush1.msra.mxu0 0.0
    %415 = vmatprep.subr.mxu0 0.0
    %416 = vmatpush1.msra.mxu0 0.0
    %417 = vmatprep.subr.mxu0 0.0
    %418 = vmatpush1.msra.mxu0 0.0
    %419 = vmatprep.subr.mxu0 0.0
    %420 = vmatpush1.msra.mxu0 0.0
    %421 = vmatprep.subr.mxu0 0.0
    %422 = vmatpush1.msra.mxu0 0.0
    %423 = vmatprep.subr.mxu0 0.0
    %424 = vmatpush1.msra.mxu0 0.0
    %425 = vmatprep.subr.mxu0 0.0
    %426 = vmatpush1.msra.mxu0 0.0
    %427 = vmatprep.subr.mxu0 0.0
    %428 = vmatpush1.msra.mxu0 0.0
    %429 = vmatprep.subr.mxu0 0.0
    %430 = vmatpush1.msra.mxu0 0.0
    %431 = vmatprep.subr.mxu0 0.0
    %432 = vmatpush1.msra.mxu0 0.0
    %433 = vmatprep.subr.mxu0 0.0
    %434 = vmatpush1.msra.mxu0 0.0
    %435 = vmatprep.subr.mxu0 0.0
    %436 = vmatpush1.msra.mxu0 0.0
    %437 = vmatprep.subr.mxu0 0.0
    %438 = vmatpush1.msra.mxu0 0.0
    %439 = vmatprep.subr.mxu0 0.0
    %440 = vmatpush1.msra.mxu0 0.0
    %441 = vmatprep.subr.mxu0 0.0
    %442 = vmatpush1.msra.mxu0 0.0
    %443 = vmatprep.subr.mxu0 0.0
    %444 = vmatpush1.msra.mxu0 0.0
    %445 = vmatprep.subr.mxu0 0.0
    %446 = vmatpush1.msra.mxu0 0.0
    %447 = vmatprep.subr.mxu0 0.0
    %448 = vmatpush1.msra.mxu0 0.0
    %449 = vmatprep.subr.mxu0 0.0
    %450 = vmatpush1.msra.mxu0 0.0
    %451 = vmatprep.subr.mxu0 0.0
    %452 = vmatpush1.msra.mxu0 0.0
    %453 = vmatprep.subr.mxu0 0.0
    %454 = vmatpush1.msra.mxu0 0.0
    %455 = vmatprep.subr.mxu0 0.0
    %456 = vmatpush1.msra.mxu0 0.0
    %457 = vmatprep.subr.mxu0 0.0
    %458 = vmatpush1.msra.mxu0 0.0
    %459 = vmatprep.subr.mxu0 0.0
    %460 = vmatpush1.msra.mxu0 0.0
    %461 = vmatprep.subr.mxu0 0.0
    %462 = vmatpush1.msra.mxu0 0.0
    %463 = vmatprep.subr.mxu0 0.0
    %464 = vmatpush1.msra.mxu0 0.0
    %465 = vmatprep.subr.mxu0 0.0
    %466 = vmatpush1.msra.mxu0 0.0
    %467 = vmatprep.mubr.f32.mxu0 0.0
    %v468 = vand.u32 %v22, 4294901760
    %469 = vmatmul.mubr.f32.gmra.mrb[0].mxu0 %v468
    %v470 = vpop.f32.mrb[0].mxu0
    %v471 = vadd.f32 %v399, %v470
    %v472 = vpop.f32.mrb[0].mxu0
    %473 = vdwg.mxu0
    %vm474 = vcmp.gt.f32.partialorder %v15, 0.5
    %v475 = vand.u32 2147483647, %v471
    %vm476 = vcmp.le.f32.partialorder %v475, 0.7853982
    %vm477 = vcmp.lt.s32.totalorder %v471, 0
    %v478 = vand.u32 %v471, 2139095040
    %v479 = vshrl.u32 %v478, 23
    %v480 = vsub.s32 %v479, 127
    %v481 = vand.u32 2147483647, %v471
    %v482 = vand.u32 %v481, 8388607
    %v483 = vor.u32 %v482, 8388608
    %v484 = vsub.s32 0, %v483
    %v485 = vadd.s32 %v480, 1
    %vm486 = vcmp.gt.s32.totalorder %v485, 0
    %v487 = vsel %vm486, %v485, 0
    %v488 = vshrl.u32 %v487, 5
    %v489 = vand.u32 %v487, 31
    %v490 = vsub.s32 32, %v489
    %v491 = vshrl.u32 683565275, %v490
    %v492 = vshll.u32 683565275, %v489
    %v493 = vshrl.u32 2475754826, %v490
    %v494 = vor.u32 %v492, %v493
    %v495 = vshll.u32 2475754826, %v489
    %v496 = vshrl.u32 2131351028, %v490
    %v497 = vor.u32 %v495, %v496
    %v498 = vshll.u32 2131351028, %v489
    %v499 = vshrl.u32 2102212464, %v490
    %v500 = vor.u32 %v498, %v499
    %v501 = vshll.u32 2102212464, %v489
    %v502 = vshrl.u32 920167782, %v490
    %v503 = vor.u32 %v501, %v502
    %v504 = vshll.u32 920167782, %v489
    %v505 = vshrl.u32 1326507024, %v490
    %v506 = vor.u32 %v504, %v505
    %vm507 = vcmp.lt.s32.totalorder %v488, 1
    %vm508 = vcmp.lt.s32.totalorder %v488, 2
    %vm509 = vcmp.lt.s32.totalorder %v488, 3
    %vm510 = vcmp.lt.s32.totalorder %v488, 4
    %v511 = vsel %vm507, %v491, %v494
    %v512 = vsel %vm510, %v500, 2102212464
    %v513 = vsel %vm509, %v497, %v512
    %v514 = vsel %vm508, %v511, %v513
    %v515 = vsel %vm507, %v494, %v497
    %v516 = vsel %vm510, %v503, 920167782
    %v517 = vsel %vm509, %v500, %v516
    %v518 = vsel %vm508, %v515, %v517
    %v519 = vsel %vm507, %v497, %v500
    %v520 = vsel %vm510, %v506, 1326507024
    %v521 = vsel %vm509, %v503, %v520
    %v522 = vsel %vm508, %v519, %v521
    %v523 = vshll.u32 %v483, 8
    %v524 = vmul.u32.u64.compose %v523, %v522
    %v525 = vextract.low.u32 %v524
    %v526 = vextract.high.u32 %v524
    %v527 = vmul.u32.u64.compose %v523, %v518
    %v528 = vextract.low.u32 %v527
    %v529 = vextract.high.u32 %v527
    %v530 = vmul.u32 %v523, %v514
    %v531 = vadd.s32 %v526, %v528
    %vm532 = vc.u32 %v526, %v528
    %v533 = vadd.s32 %v529, 1
    %v534 = vsel %vm532, %v533, %v529
    %v535 = vadd.s32 %v530, %v534
    %v536 = vadd.s32 %v535, 536870912
    %v537 = vshrl.u32 %v536, 30
    %v538 = vshll.u32 %v537, 30
    %v539 = vsub.s32 %v535, %v538
    %vm540 = vcmp.lt.s32.totalorder %v539, 0
    %v541 = vsub.s32 0, %v539
    %v542 = vsel %vm540, %v541, %v539
    %v543 = vclz %v542
    %v544 = vsub.s32 %v543, 2
    %vm545 = vcmp.gt.s32.totalorder 0, %v544
    %v546 = vsel %vm545, 0, %v544
    %v547 = vsub.s32 32, %v546
    %v548 = vshll.u32 %v539, %v546
    %v549 = vshrl.u32 %v531, %v547
    %v550 = vor.u32 %v548, %v549
    %v551 = vsub.s32 4294967266, %v546
    %v552 = vadd.s32 %v551, 127
    %v553 = vshll.u32 %v552, 23
    %v554 = vor.u32 4788187, %v553
    %v555 = vand.u32 2147483647, %v554
    %v557 = vcvt.s32.f32 %v550
    %v558 = vmul.f32 %v557, %v555
    %v559 = vxor.u32 %v558, 2147483648
    %v560 = vsel %vm477, %v559, %v558
    %v561 = vsub.s32 4, %v537
    %v562 = vsel %vm477, %v561, %v537
    %v563 = vsel %vm476, %v471, %v560
    %v564 = vsel %vm476, 0, %v562
    %v565 = vcosq.f32.pop %v563
    %v566 = vsinq.f32.pop %v563
    %vm567 = vweird.f32 %v471
    %v568 = vadd.s32 %v564, 3
    %v569 = vand.u32 %v568, 3
    %vm570 = vcmp.lt.s32.totalorder %v569, 2
    %vm571 = vcmp.eq.s32.totalorder %v569, 0
    %v572 = vxor.u32 %v566, 2147483648
    %v573 = vsel %vm571, %v565, %v572
    %vm574 = vcmp.eq.s32.totalorder %v569, 2
    %v575 = vxor.u32 %v565, 2147483648
    %v576 = vsel %vm574, %v575, %v566
    %v577 = vsel %vm570, %v573, %v576
    %v578 = vsel %vm567, nan, %v577
    %v579 = vsel %vm474, 1, 0
    %v580 = vlaneseq
    %v581 = vshrl.u32 %v580, 7
    %v582 = vsub.s32 0, %v581
    %v583 = vrot.slane %v579, %v582
    %vm584 = vcmp.eq.s32.totalorder %v583, 1
    %v585 = vsel %vm584, %v578, %v471
    %586 = vst [vmem:[#allocation2] sm:$0xff] %v585
    // Predicated region
    $region10: #{tpu_custom_call.1} parent=1 // pred_check
      _
    $region11: #{tpu_custom_call.1} parent=1 // pred_check_branch
      %588 = sbr.rel (0) target = $region13
    $region12: #{tpu_custom_call.1} parent=1 // pred_region
      %s590 = ssub.s32 128, 128
      %591 = vsyncadd [#allocation3], %s590
      %s593 = sshll.u32 [#allocation2], 4
      %s594 = int_to_ptr.vmem [resolvable:$true] %s593
      %596 = dma.vmem_to_hbm [thread:$0]  %s594, 128, %s2, [#allocation3]
    $region13: #{tpu_custom_call.1} parent=1 // pred_fallthru
      _
    // Predicated region
    $region14: #{tpu_custom_call.1} parent=1 // pred_check
      _
    $region15: #{tpu_custom_call.1} parent=1 // pred_check_branch
      %598 = sbr.rel (0) target = $region17
    $region16: #{tpu_custom_call.1} parent=1 // pred_region
      %599 = dma.done [#allocation3], 128
    $region17: #{tpu_custom_call.1} parent=1 // pred_fallthru
      _
    %600 = vsyncpa [#allocation3], 1

</llo_original>
